<compile_context>
chip_gen: v7x
topology: tpu7x:2x2x1
jax: 0.10.0
libtpu: 0.0.40
codegen_flags: <defaults>
</compile_context>

<pallas_src>
import functools

import jax
import jax.numpy as jnp
from jax import lax
from jax.experimental import pallas as pl
from jax.experimental.pallas import tpu as pltpu

# ----------------------------------------------------------------------------
# "cfg" that Preprocessor.__init__ would receive (deterministic, in-script).
# ----------------------------------------------------------------------------
VOXEL_SIZE = (0.5, 0.5, 0.5)                    # (vx, vy, vz)
GRID_BOUNDS = (0.0, 0.0, 0.0, 4.0, 4.0, 2.0)    # (xmin, ymin, zmin, xmax, ymax, zmax)
GRID_DIMS = tuple(
    int(round((GRID_BOUNDS[i + 3] - GRID_BOUNDS[i]) / VOXEL_SIZE[i])) for i in range(3)
)                                               # (nx, ny, nz) = (8, 8, 4)
NX, NY, NZ = GRID_DIMS
NUM_VOXELS = NX * NY * NZ                       # 256 (multiple of 128 -> lane-dense)
MAX_VOXELS = NUM_VOXELS                         # dense grid fits under MAX_VOXELS
MAX_OCCUPANCY = 5                               # max points counted per voxel

XMIN, YMIN, ZMIN = GRID_BOUNDS[0], GRID_BOUNDS[1], GRID_BOUNDS[2]
INV_VX = 1.0 / VOXEL_SIZE[0]                    # compile-time reciprocals (no EUP div)
INV_VY = 1.0 / VOXEL_SIZE[1]
INV_VZ = 1.0 / VOXEL_SIZE[2]

C_PAD = 8                                       # channel dim padded 4 -> 8 (sublane-aligned)
COUNT_ROW = 4                                   # row of the ones/count channel
# Point-tile size along the reduction axis.  512 keeps the (V, TILE_NP) one-hot
# at 0.5 MiB f32 (safe on v5e/v6e/v7x); bump to 2048 (v7x) / 4096-8192 (v5e/v6e)
# for large lidar clouds.
TILE_NP = 512

SENTINEL_X = XMIN - 100.0                       # out-of-bounds x => padded point ignored


# ----------------------------------------------------------------------------
# Pallas kernel: fused voxelization reduction over one (batch, point-tile) step.
#   pts_ref : (8, TILE_NP)      f32  transposed, channel-padded point tile
#   out_ref : (8, NUM_VOXELS)   f32  accumulator (rows 0..3 = feature sums,
#                                     row 4 = occupancy counts)
# Grid = (B, Np_pad // TILE_NP); batch axis parallel, point axis arbitrary
# (reduction, last); output block is resident across the reduction axis.
# ----------------------------------------------------------------------------
def _voxelize_kernel(pts_ref, out_ref):
    k = pl.program_id(1)

    pts = pts_ref[...]                                    # (8, TILE_NP)
    x = pts[0:1, :]                                       # (1, TILE_NP) lane-dense
    y = pts[1:2, :]
    z = pts[2:3, :]

    ix = jnp.floor((x - XMIN) * INV_VX).astype(jnp.int32)
    iy = jnp.floor((y - YMIN) * INV_VY).astype(jnp.int32)
    iz = jnp.floor((z - ZMIN) * INV_VZ).astype(jnp.int32)

    valid = ((ix >= 0) & (ix < NX) &
             (iy >= 0) & (iy < NY) &
             (iz >= 0) & (iz < NZ))                       # (1, TILE_NP)

    # Clamp before the flat-index math so extreme sentinels can never overflow
    # int32 regardless of voxel size; invalid points are forced to -1 anyway.
    ixc = jnp.clip(ix, 0, NX - 1)
    iyc = jnp.clip(iy, 0, NY - 1)
    izc = jnp.clip(iz, 0, NZ - 1)
    flat = jnp.where(valid, (izc * NY + iyc) * NX + ixc, -1)   # (1, TILE_NP)

    # Transposed one-hot (V, TILE_NP): both operands keep the point axis on lanes.
    vox_ids = lax.broadcasted_iota(jnp.int32, (NUM_VOXELS, TILE_NP), 0)
    onehot_t = (flat == vox_ids).astype(jnp.float32)      # (V, TILE_NP)

    # (8, V) = pts (8, Np) . onehot_t (V, Np)^T  — feature sums + count row in
    # one MXU contraction, lane-dense output (V = 2 full vregs per row group).
    contrib = lax.dot_general(
        pts, onehot_t,
        dimension_numbers=(((1,), (1,)), ((), ())),
        preferred_element_type=jnp.float32)               # (8, V)

    @pl.when(k == 0)
    def _():
        out_ref[...] = jnp.zeros_like(out_ref)

    out_ref[...] += contrib


@jax.jit
def voxelize_dense(pts_t):
    """pts_t: (B, 8, Np_pad) f32, padded columns set out-of-bounds.

    Returns (B, 8, NUM_VOXELS): rows 0..3 feature sums, row 4 counts.
    """
    B, c8, np_pad = pts_t.shape
    assert c8 == C_PAD and np_pad % TILE_NP == 0
    nk = np_pad // TILE_NP
    return pl.pallas_call(
        _voxelize_kernel,
        out_shape=jax.ShapeDtypeStruct((B, C_PAD, NUM_VOXELS), jnp.float32),
        grid=(B, nk),
        in_specs=[pl.BlockSpec((None, C_PAD, TILE_NP), lambda b, k: (b, 0, k))],
        out_specs=pl.BlockSpec((None, C_PAD, NUM_VOXELS), lambda b, k: (b, 0, 0)),
        compiler_params=pltpu.CompilerParams(
            dimension_semantics=("parallel", "arbitrary")),
    )(pts_t)


# ----------------------------------------------------------------------------
# Preprocessor.forward equivalent (glue around the kernel).
# ----------------------------------------------------------------------------
def preprocessor_forward(item):
    points_list = item["points"]            # length-B list of (Ni, 4) arrays
    B = len(points_list)
    n_max = max(int(p.shape[0]) for p in points_list)
    np_pad = int(pl.cdiv(n_max, TILE_NP)) * TILE_NP       # kernel reduction padding

    # pad_for_batch: pad each cloud to n_max with resampled points.
    # TODO(synk): reference uses np.random.choice; replaced by deterministic jax.random.
    pad_key = jax.random.PRNGKey(1234)
    padded_out, kernel_in = [], []
    for i, p in enumerate(points_list):
        p = jnp.asarray(p, jnp.float32)
        n_i = p.shape[0]

        # (B, n_max, 4) "points" output: resample real points for the pad.
        pad_i = n_max - n_i
        idx = jax.random.choice(jax.random.fold_in(pad_key, i), n_i, (pad_i,))
        padded_out.append(jnp.concatenate([p, p[idx]], axis=0))

        # Kernel input: transposed (8, np_pad) with a ones "count" row; padded
        # columns get an out-of-bounds x so they never contribute.
        block = jnp.concatenate(
            [p.T,                                        # (4, n_i) x,y,z,refl
             jnp.ones((1, n_i), jnp.float32),            # count row
             jnp.zeros((3, n_i), jnp.float32)], axis=0)  # channel pad to 8
        pad_cols = np_pad - n_i
        pad_block = jnp.zeros((C_PAD, pad_cols), jnp.float32)
        pad_block = pad_block.at[0, :].set(SENTINEL_X)   # invalid x => masked out
        kernel_in.append(jnp.concatenate([block, pad_block], axis=1))

    points_out = jnp.stack(padded_out, axis=0)           # (B, n_max, 4)
    pts_t = jnp.stack(kernel_in, axis=0)                 # (B, 8, np_pad)

    # ---- Pallas voxelization hot path (single fused contraction) ----
    vox = voxelize_dense(pts_t)                          # (B, 8, V)
    occ_f = vox[:, COUNT_ROW, :]                         # (B, V) per-voxel counts
    featsum = jnp.transpose(vox[:, 0:4, :], (0, 2, 1))   # (B, V, 4)

    counts = occ_f.astype(jnp.int32)
    # TODO(synk): spconv keeps up to MAX_OCCUPANCY raw points per voxel
    # ((Nv, max_pts, 4)); here the per-voxel feature is the mean of its points.
    mean_feat = featsum / jnp.maximum(occ_f, 1.0)[..., None]       # (B, V, 4)
    occupancy = jnp.minimum(counts, MAX_OCCUPANCY)                 # (B, V)

    # Voxel coordinates in (z, y, x) order (spconv convention),
    # matching flat = (z*ny + y)*nx + x.
    v = jnp.arange(NUM_VOXELS, dtype=jnp.int32)
    coords_zyx = jnp.stack([v // (NX * NY), (v // NX) % NY, v % NX], axis=-1)  # (V, 3)

    # Dense stand-in for dynamic compaction: occupied voxels first, then truncate.
    # TODO(synk): spconv returns a data-dependent number of voxels; TPU output is
    # fixed-size (B * MAX_VOXELS) with empty slots marked by coordinate -1.
    order = jnp.argsort(-counts, axis=1)                          # (B, V)
    counts_s = jnp.take_along_axis(counts, order, axis=1)
    occ_s = jnp.take_along_axis(occupancy, order, axis=1)
    feat_s = jnp.take_along_axis(mean_feat, order[..., None], axis=1)
    coords_s = coords_zyx[order]                                  # (B, V, 3)

    batch_idx = jnp.broadcast_to(
        jnp.arange(B, dtype=jnp.int32)[:, None, None], (B, NUM_VOXELS, 1))
    coords_b = jnp.concatenate([batch_idx, coords_s.astype(jnp.int32)], axis=-1)

    empty = (counts_s == 0)[..., None]
    coords_b = jnp.where(empty, -1, coords_b)
    feat_s = jnp.where(empty, 0.0, feat_s)

    counts_s = counts_s[:, :MAX_VOXELS]
    occ_s = occ_s[:, :MAX_VOXELS]
    feat_s = feat_s[:, :MAX_VOXELS]
    coords_b = coords_b[:, :MAX_VOXELS]

    features = feat_s.reshape(B * MAX_VOXELS, 4).astype(jnp.float32)
    coordinates = coords_b.reshape(B * MAX_VOXELS, 4).astype(jnp.int32)
    # TODO(synk): reference occupancy is torch LongTensor (int64); int32 without x64.
    occupancy_out = occ_s.reshape(B * MAX_VOXELS).astype(jnp.int32)

    item.update({
        "points": points_out,            # (B, Np, 4) float32
        "features": features,            # (B*MAX_VOXELS, 4) float32
        "coordinates": coordinates,      # (B*MAX_VOXELS, 4) int32, (b, z, y, x)
        "occupancy": occupancy_out,      # (B*MAX_VOXELS,)  int32
        "batch_size": B,
    })
    return item


if __name__ == "__main__":
    key = jax.random.PRNGKey(0)
    k0, k1 = jax.random.split(key)

    # Two point clouds of different lengths (exercises pad_for_batch),
    # points roughly inside GRID_BOUNDS with a few outliers.
    def make_cloud(k, n):
        kx, kr = jax.random.split(k)
        xyz = jax.random.uniform(kx, (n, 3), jnp.float32,
                                 minval=-0.5, maxval=4.5)
        xyz = xyz.at[:, 2].multiply(0.5)                     # z roughly in [-0.25, 2.25]
        refl = jax.random.uniform(kr, (n, 1), jnp.float32)
        return jnp.concatenate([xyz, refl], axis=-1)

    points = [make_cloud(k0, 64), make_cloud(k1, 48)]
    item = {"points": points}

    out = preprocessor_forward(item)
    jax.block_until_ready(out["features"])
    jax.block_until_ready(out["coordinates"])
    jax.block_until_ready(out["occupancy"])
    jax.block_until_ready(out["points"])

    assert out["points"].shape == (2, 64, 4)
    assert out["features"].shape == (2 * MAX_VOXELS, 4)
    assert out["coordinates"].shape == (2 * MAX_VOXELS, 4)
    assert out["occupancy"].shape == (2 * MAX_VOXELS,)
    assert out["batch_size"] == 2

    # Sanity: total counted points per batch == number of in-bounds points.
    total_occ = out["occupancy"].reshape(2, MAX_VOXELS).sum(axis=1)
    assert bool(jnp.all(total_occ > 0))

    print("KERNEL_OK")
</pallas_src>

<mosaic_0001>
module attributes {stable_mosaic.version = 11 : i64} {
  func.func @_voxelize_kernel(%arg0: i32, %arg1: i32, %arg2: memref<1x8x512xf32, #tpu.memory_space<vmem>>, %arg3: memref<1x8x256xf32, #tpu.memory_space<vmem>>) attributes {dimension_semantics = [#tpu.dimension_semantics<parallel>, #tpu.dimension_semantics<arbitrary>], iteration_bounds = array<i64: 2, 1>, scalar_prefetch = 0 : i64, scratch_operands = 0 : i64, tpu.core_type = #tpu.core_type<tc>, window_params = [{transform_indices = @transform_0, window_bounds = array<i64: 1, 8, 512>}, {transform_indices = @transform_1, window_bounds = array<i64: 1, 8, 256>}]} {
    %c0 = arith.constant 0 : index
    %c0_0 = arith.constant 0 : index
    %c0_1 = arith.constant 0 : index
    %0 = vector.load %arg2[%c0, %c0_0, %c0_1] : memref<1x8x512xf32, #tpu.memory_space<vmem>>, vector<1x8x512xf32>
    %1 = vector.shape_cast %0 : vector<1x8x512xf32> to vector<8x512xf32>
    %2 = vector.extract_strided_slice %1 {offsets = [0, 0], sizes = [1, 512], strides = [1, 1]} : vector<8x512xf32> to vector<1x512xf32>
    %3 = vector.extract_strided_slice %1 {offsets = [1, 0], sizes = [1, 512], strides = [1, 1]} : vector<8x512xf32> to vector<1x512xf32>
    %4 = vector.extract_strided_slice %1 {offsets = [2, 0], sizes = [1, 512], strides = [1, 1]} : vector<8x512xf32> to vector<1x512xf32>
    %cst = arith.constant 0.000000e+00 : f32
    %5 = vector.broadcast %cst : f32 to vector<1x512xf32>
    %6 = arith.subf %2, %5 : vector<1x512xf32>
    %cst_2 = arith.constant 2.000000e+00 : f32
    %7 = vector.broadcast %cst_2 : f32 to vector<1x512xf32>
    %8 = arith.mulf %6, %7 : vector<1x512xf32>
    %9 = math.floor %8 : vector<1x512xf32>
    %10 = arith.fptosi %9 : vector<1x512xf32> to vector<1x512xi32>
    %cst_3 = arith.constant 0.000000e+00 : f32
    %11 = vector.broadcast %cst_3 : f32 to vector<1x512xf32>
    %12 = arith.subf %3, %11 : vector<1x512xf32>
    %cst_4 = arith.constant 2.000000e+00 : f32
    %13 = vector.broadcast %cst_4 : f32 to vector<1x512xf32>
    %14 = arith.mulf %12, %13 : vector<1x512xf32>
    %15 = math.floor %14 : vector<1x512xf32>
    %16 = arith.fptosi %15 : vector<1x512xf32> to vector<1x512xi32>
    %cst_5 = arith.constant 0.000000e+00 : f32
    %17 = vector.broadcast %cst_5 : f32 to vector<1x512xf32>
    %18 = arith.subf %4, %17 : vector<1x512xf32>
    %cst_6 = arith.constant 2.000000e+00 : f32
    %19 = vector.broadcast %cst_6 : f32 to vector<1x512xf32>
    %20 = arith.mulf %18, %19 : vector<1x512xf32>
    %21 = math.floor %20 : vector<1x512xf32>
    %22 = arith.fptosi %21 : vector<1x512xf32> to vector<1x512xi32>
    %c0_i32 = arith.constant 0 : i32
    %23 = vector.broadcast %c0_i32 : i32 to vector<1x512xi32>
    %24 = arith.cmpi sge, %10, %23 : vector<1x512xi32>
    %c8_i32 = arith.constant 8 : i32
    %25 = vector.broadcast %c8_i32 : i32 to vector<1x512xi32>
    %26 = arith.cmpi slt, %10, %25 : vector<1x512xi32>
    %27 = arith.andi %24, %26 : vector<1x512xi1>
    %c0_i32_7 = arith.constant 0 : i32
    %28 = vector.broadcast %c0_i32_7 : i32 to vector<1x512xi32>
    %29 = arith.cmpi sge, %16, %28 : vector<1x512xi32>
    %30 = arith.andi %27, %29 : vector<1x512xi1>
    %c8_i32_8 = arith.constant 8 : i32
    %31 = vector.broadcast %c8_i32_8 : i32 to vector<1x512xi32>
    %32 = arith.cmpi slt, %16, %31 : vector<1x512xi32>
    %33 = arith.andi %30, %32 : vector<1x512xi1>
    %c0_i32_9 = arith.constant 0 : i32
    %34 = vector.broadcast %c0_i32_9 : i32 to vector<1x512xi32>
    %35 = arith.cmpi sge, %22, %34 : vector<1x512xi32>
    %36 = arith.andi %33, %35 : vector<1x512xi1>
    %c4_i32 = arith.constant 4 : i32
    %37 = vector.broadcast %c4_i32 : i32 to vector<1x512xi32>
    %38 = arith.cmpi slt, %22, %37 : vector<1x512xi32>
    %39 = arith.andi %36, %38 : vector<1x512xi1>
    %c0_i32_10 = arith.constant 0 : i32
    %c7_i32 = arith.constant 7 : i32
    %40 = vector.broadcast %c0_i32_10 : i32 to vector<1x512xi32>
    %41 = arith.maxsi %40, %10 : vector<1x512xi32>
    %42 = vector.broadcast %c7_i32 : i32 to vector<1x512xi32>
    %43 = arith.minsi %42, %41 : vector<1x512xi32>
    %c0_i32_11 = arith.constant 0 : i32
    %c7_i32_12 = arith.constant 7 : i32
    %44 = vector.broadcast %c0_i32_11 : i32 to vector<1x512xi32>
    %45 = arith.maxsi %44, %16 : vector<1x512xi32>
    %46 = vector.broadcast %c7_i32_12 : i32 to vector<1x512xi32>
    %47 = arith.minsi %46, %45 : vector<1x512xi32>
    %c0_i32_13 = arith.constant 0 : i32
    %c3_i32 = arith.constant 3 : i32
    %48 = vector.broadcast %c0_i32_13 : i32 to vector<1x512xi32>
    %49 = arith.maxsi %48, %22 : vector<1x512xi32>
    %50 = vector.broadcast %c3_i32 : i32 to vector<1x512xi32>
    %51 = arith.minsi %50, %49 : vector<1x512xi32>
    %c8_i32_14 = arith.constant 8 : i32
    %52 = vector.broadcast %c8_i32_14 : i32 to vector<1x512xi32>
    %53 = arith.muli %51, %52 : vector<1x512xi32>
    %54 = arith.addi %53, %47 : vector<1x512xi32>
    %c8_i32_15 = arith.constant 8 : i32
    %55 = vector.broadcast %c8_i32_15 : i32 to vector<1x512xi32>
    %56 = arith.muli %54, %55 : vector<1x512xi32>
    %57 = arith.addi %56, %43 : vector<1x512xi32>
    %c-1_i32 = arith.constant -1 : i32
    %58 = vector.broadcast %c-1_i32 : i32 to vector<1x512xi32>
    %59 = arith.select %39, %57, %58 : vector<1x512xi1>, vector<1x512xi32>
    %60 = tpu.iota {dimensions = array<i32: 0>} : vector<256x512xi32>
    %61 = vector.broadcast %59 : vector<1x512xi32> to vector<256x512xi32>
    %62 = arith.cmpi eq, %61, %60 : vector<256x512xi32>
    %63 = arith.extui %62 : vector<256x512xi1> to vector<256x512xi32>
    %64 = arith.sitofp %63 : vector<256x512xi32> to vector<256x512xf32>
    %cst_16 = arith.constant dense<0.000000e+00> : vector<8x256xf32>
    %65 = tpu.matmul %1, %64, %cst_16 {dimension_numbers = #tpu.dot_dimension_numbers<[1], [1], [0], [0], [0, 0, 1, 0], [], []>} : vector<8x512xf32>, vector<256x512xf32>, vector<8x256xf32> -> vector<8x256xf32>
    %c0_i32_17 = arith.constant 0 : i32
    %66 = arith.cmpi eq, %arg1, %c0_i32_17 : i32
    %67 = arith.extui %66 : i1 to i32
    %c0_i32_18 = arith.constant 0 : i32
    %68 = arith.cmpi ne, %67, %c0_i32_18 : i32
    scf.if %68 {
      %cst_25 = arith.constant 0.000000e+00 : f32
      %75 = vector.broadcast %cst_25 : f32 to vector<8x256xf32>
      %c0_26 = arith.constant 0 : index
      %c0_27 = arith.constant 0 : index
      %c0_28 = arith.constant 0 : index
      %76 = vector.load %arg3[%c0_26, %c0_27, %c0_28] : memref<1x8x256xf32, #tpu.memory_space<vmem>>, vector<1x8x256xf32>
      %77 = vector.shape_cast %76 : vector<1x8x256xf32> to vector<8x256xf32>
      %78 = vector.shape_cast %75 : vector<8x256xf32> to vector<1x8x256xf32>
      tpu.vector_store %arg3[%c0_26, %c0_27, %c0_28], %78 {strides = array<i32>} : memref<1x8x256xf32, #tpu.memory_space<vmem>>, vector<1x8x256xf32>,
    } else {
    }
    %c0_19 = arith.constant 0 : index
    %c0_20 = arith.constant 0 : index
    %c0_21 = arith.constant 0 : index
    %69 = vector.load %arg3[%c0_19, %c0_20, %c0_21] : memref<1x8x256xf32, #tpu.memory_space<vmem>>, vector<1x8x256xf32>
    %70 = vector.shape_cast %69 : vector<1x8x256xf32> to vector<8x256xf32>
    %71 = arith.addf %70, %65 : vector<8x256xf32>
    %c0_22 = arith.constant 0 : index
    %c0_23 = arith.constant 0 : index
    %c0_24 = arith.constant 0 : index
    %72 = vector.load %arg3[%c0_22, %c0_23, %c0_24] : memref<1x8x256xf32, #tpu.memory_space<vmem>>, vector<1x8x256xf32>
    %73 = vector.shape_cast %72 : vector<1x8x256xf32> to vector<8x256xf32>
    %74 = vector.shape_cast %71 : vector<8x256xf32> to vector<1x8x256xf32>
    tpu.vector_store %arg3[%c0_22, %c0_23, %c0_24], %74 {strides = array<i32>} : memref<1x8x256xf32, #tpu.memory_space<vmem>>, vector<1x8x256xf32>,
    return
  }
  func.func @transform_0(%arg0: i32, %arg1: i32) -> (i32, i32, i32) {
    %c0_i32 = arith.constant 0 : i32
    %c0_i32_0 = arith.constant 0 : i32
    return %arg0, %c0_i32, %arg1 : i32, i32, i32
  }
  func.func @transform_1(%arg0: i32, %arg1: i32) -> (i32, i32, i32) {
    %c0_i32 = arith.constant 0 : i32
    %c0_i32_0 = arith.constant 0 : i32
    %c0_i32_1 = arith.constant 0 : i32
    return %arg0, %c0_i32, %c0_i32_0 : i32, i32, i32
  }
}

</mosaic_0001>

<llo_original>
// kernel: voxelize_dense.1
$region0: #{voxelize_dense.1}
  #allocation0 [shape = 'u32[]', space=smem, size = 0x4, offset = 0x4, fixed_abs, tag = 'smem constant byte address 0x4 - core index']
  #allocation1 [shape = 'u32[144,128]{1,0:T(1,128)}', space=vmem, size = 0x12000, scoped, tag = 'internal scratch']
  %s0 = inlined_call_operand.hbm [shape: f32[2,8,512], index: 0, kind: input, shape index: {}]
  %s1 = inlined_call_operand.hbm [shape: f32[2,8,256], index: 1, kind: output, shape index: {}]
  %s2 = sld [smem:[#allocation0]]
  $region45: #{voxelize_dense.1} parent=0
    _
  %s4 = ssub.s32 1, %s2
  %s5 = scalar_select 0, %s4, %s2
  $region1: #{voxelize_dense.1} parent=0
    #allocation2 [shape = 'u8[32768]{0}', space=vmem, size = 0x8000, scoped, tag = 'input window, operand 0']
    #allocation3 [shape = 's32[2]{0}', space=sflag, size = 0x8, scoped, tag = 'scoped memory for voxelize_dense.1']
    #allocation4 [shape = 's32[2]{0}', space=sflag, size = 0x8, scoped, tag = 'scoped memory for voxelize_dense.1']
    #allocation5 [shape = 'u8[16384]{0}', space=vmem, size = 0x4000, scoped, tag = 'output window, operand 0']
    %6 = vsyncpa [#allocation3], 0
    %s7 = scalar_lea.sflag [#allocation3], 1
    %8 = vsyncpa %s7, 0
    %9 = vsyncpa [#allocation4], 0
    %s10 = scalar_lea.sflag [#allocation4], 1
    %11 = vsyncpa %s10, 0
    loop: start=0, step=1, limit=4
    $region2: #{voxelize_dense.1} parent=1 // loop_pre_header
      _
    $region3: #{voxelize_dense.1} parent=1 // loop_header
      %s13 = sphi 0, %s17
      %p14 = scmp.ge.s32.totalorder %s13, 4
      %s20 = sphi 0, %s32
      %s21 = sphi 0, %s28
      %s22 = sphi 0, %s20
      %s23 = sphi 0, %s21
      %s24 = sphi 0, %s22
      %s25 = sphi 0, %s23
      %s37 = sphi 0, %s39
      %s40 = sphi 0, %s37
      %s41 = sphi 0, %s40
      %s57 = sphi 0, %s41
      %s63 = sphi 0, %s65
      %s66 = sphi 0, %s63
      %s67 = sphi 0, %s66
      %s83 = sphi 0, %s67
    $region4: #{voxelize_dense.1} parent=1 // loop_header_branch
      %16 = sbr.rel (%p14) target = $region8
    $region5: #{voxelize_dense.1} parent=1 // loop_body
      %s18 = ssub.s32 %s13, 1
      %s19 = ssub.s32 %s13, 2
      %s26 = sadd.s32 1, %s21
      %p27 = scmp.ge.s32.totalorder %s26, 1
      %s28 = scalar_select %p27, 0, %s26
      %s29 = sadd.s32 1, %s20
      %s30 = scalar_select %p27, %s29, %s20
      %p31 = scmp.ge.s32.totalorder %s30, 2
      %s32 = scalar_select %p31, 0, %s30
      %s33 = ssub.s32 %s20, %s32
      %s34 = ssub.s32 %s21, %s28
      %s35 = sor.u32 %s33, %s34
      %p36 = scmp.eq.s32.totalorder %s35, 0
      %s38 = sadd.s32 %s37, 1
      %s39 = scalar_select %p36, %s37, %s38
      %p42 = pneg %p36
      %p43 = scmp.eq.s32.totalorder %s13, 1
      %p44 = por %p42, %p43
      %p45 = scmp.ne.s32.totalorder %s37, %s40
      %p46 = scmp.eq.s32.totalorder %s13, 0
      %p47 = por %p45, %p46
      %p48 = scmp.ne.s32.totalorder %s37, %s40
      %p49 = scmp.eq.s32.totalorder %s18, 1
      %p50 = por %p48, %p49
      %p51 = scmp.ne.s32.totalorder %s40, %s41
      %p52 = scmp.eq.s32.totalorder %s18, 0
      %p53 = por %p51, %p52
      %p54 = scmp.ne.s32.totalorder %s40, %s41
      %p55 = scmp.eq.s32.totalorder %s19, 1
      %p56 = por %p54, %p55
      %p58 = scmp.ne.s32.totalorder %s41, %s57
      %p59 = scmp.eq.s32.totalorder %s19, 0
      %p60 = por %p58, %p59
      %s61 = ssub.s32 %s20, %s32
      %p62 = scmp.eq.s32.totalorder %s61, 0
      %s64 = sadd.s32 %s63, 1
      %s65 = scalar_select %p62, %s63, %s64
      %p68 = pneg %p62
      %p69 = scmp.eq.s32.totalorder %s13, 1
      %p70 = por %p68, %p69
      %p71 = scmp.ne.s32.totalorder %s63, %s66
      %p72 = scmp.eq.s32.totalorder %s13, 0
      %p73 = por %p71, %p72
      %p74 = scmp.ne.s32.totalorder %s63, %s66
      %p75 = scmp.eq.s32.totalorder %s18, 1
      %p76 = por %p74, %p75
      %p77 = scmp.ne.s32.totalorder %s66, %s67
      %p78 = scmp.eq.s32.totalorder %s18, 0
      %p79 = por %p77, %p78
      %p80 = scmp.ne.s32.totalorder %s66, %s67
      %p81 = scmp.eq.s32.totalorder %s19, 1
      %p82 = por %p80, %p81
      %p84 = scmp.ne.s32.totalorder %s67, %s83
      %p85 = scmp.eq.s32.totalorder %s19, 0
      %p86 = por %p84, %p85
      %p87 = scmp.le.s32.totalorder 1, %s13
      %p88 = scmp.lt.s32.totalorder %s13, 3
      %p89 = pnand %p87, %p88
      %p90 = pneg %p89
      // Predicated region
      $region9: #{voxelize_dense.1} parent=5 // pred_check
        _
      $region10: #{voxelize_dense.1} parent=5 // pred_check_branch
        %92 = sbr.rel (%p89) target = $region12
      $region11: #{voxelize_dense.1} parent=5 // pred_region
        %s93 = ssub.s32 %s13, 1
      $region12: #{voxelize_dense.1} parent=5 // pred_fallthru
        _
      %p94 = scmp.lt.s32.totalorder %s13, 2
      // Predicated region
      $region13: #{voxelize_dense.1} parent=5 // pred_check
        %p95 = pneg %p94
      $region14: #{voxelize_dense.1} parent=5 // pred_check_branch
        %97 = sbr.rel (%p95) target = $region16
      $region15: #{voxelize_dense.1} parent=5 // pred_region
        // Predicated region
        $region17: #{voxelize_dense.1} parent=15 // pred_check
          %p98 = pneg %p47
        $region18: #{voxelize_dense.1} parent=15 // pred_check_branch
          %100 = sbr.rel (%p98) target = $region20
        $region19: #{voxelize_dense.1} parent=15 // pred_region
          %s101 = sand.u32 %s37, 1
          %s102 = scalar_lea.sflag [#allocation3], %s101
          %s103 = sand.u32 %s37, 1
          %s104 = smul.addr %s103, 32
          %s105 = scalar_lea.vmem [#allocation2], %s104
          %s106 = smul.u32 4, %s21
          %s108 = ssub.s32 512, 512
          %109 = vsyncadd %s102, %s108
          %s110 = smul.addr %s20, 4
          %s111 = sadd.s32 %s106, %s110
          %s112 = smul.addr %s111, 128
          %s113 = scalar_lea.hbm %s0, %s112
          %s115 = sshll.u32 %s105, 4
          %s116 = int_to_ptr.vmem [resolvable:$true] %s115
          %118 = dma.hbm_to_vmem [thread:$0]  %s113, 512, %s116, %s102
        $region20: #{voxelize_dense.1} parent=15 // pred_fallthru
          _
      $region16: #{voxelize_dense.1} parent=5 // pred_fallthru
        _
      %p119 = scmp.le.s32.totalorder 1, %s13
      %p120 = scmp.lt.s32.totalorder %s13, 3
      %p121 = pnand %p119, %p120
      %p122 = pneg %p121
      // Predicated region
      $region21: #{voxelize_dense.1} parent=5 // pred_check
        _
      $region22: #{voxelize_dense.1} parent=5 // pred_check_branch
        %124 = sbr.rel (%p121) target = $region24
      $region23: #{voxelize_dense.1} parent=5 // pred_region
        %s125 = ssub.s32 %s13, 1
        %s126 = sand.u32 %s40, 1
        %s127 = scalar_lea.sflag [#allocation3], %s126
        %s128 = sand.u32 %s40, 1
        %s129 = smul.addr %s128, 32
        %s130 = scalar_lea.vmem [#allocation2], %s129
        // Predicated region
        $region25: #{voxelize_dense.1} parent=23 // pred_check
          %p131 = pneg %p53
        $region26: #{voxelize_dense.1} parent=23 // pred_check_branch
          %133 = sbr.rel (%p131) target = $region28
        $region27: #{voxelize_dense.1} parent=23 // pred_region
          %134 = dma.done %s127, 512
        $region28: #{voxelize_dense.1} parent=23 // pred_fallthru
          _
        %s135 = sand.u32 %s40, 1
        %s136 = scalar_lea.sflag [#allocation3], %s135
        %s137 = sand.u32 %s40, 1
        %s138 = smul.addr %s137, 32
        %s139 = scalar_lea.vmem [#allocation2], %s138
        %p140 = pneg %p53
        %p141 = pneg %p50
        %p142 = pneg %p79
        %p143 = pneg %p76
        %s144 = sand.u32 %s66, 1
        %s145 = scalar_lea.sflag [#allocation4], %s144
        %s146 = sand.u32 %s66, 1
        %s147 = smul.addr %s146, 16
        %s148 = scalar_lea.vmem [#allocation5], %s147
        %s149 = smul.u32 4, %s23
        %v150 = vld [vmem:[%s130] sm:$0xff]
        %v151 = vld [vmem:[%s130 + $0x8] sm:$0xff]
        %v152 = vld [vmem:[%s130 + $0x10] sm:$0xff]
        %v153 = vld [vmem:[%s130 + $0x18] sm:$0xff]
        %v154 = vmul.f32 %v150, 2.0
        %v155 = vmul.f32 %v151, 2.0
        %v156 = vmul.f32 %v152, 2.0
        %v157 = vmul.f32 %v153, 2.0
        %v158 = vfloor.f32 %v154
        %v159 = vfloor.f32 %v155
        %v160 = vfloor.f32 %v156
        %v161 = vfloor.f32 %v157
        %v162 = vcvt.f32.s32.to.zero.pseudo %v158
        %v163 = vcvt.f32.s32.to.zero.pseudo %v159
        %v164 = vcvt.f32.s32.to.zero.pseudo %v160
        %v165 = vcvt.f32.s32.to.zero.pseudo %v161
        %vm166 = vcmp.ge.s32.totalorder %v162, 0
        %vm167 = vcmp.ge.s32.totalorder %v163, 0
        %vm168 = vcmp.ge.s32.totalorder %v164, 0
        %vm169 = vcmp.ge.s32.totalorder %v165, 0
        %vm170 = vcmp.lt.s32.totalorder %v162, 8
        %vm171 = vcmp.lt.s32.totalorder %v163, 8
        %vm172 = vcmp.lt.s32.totalorder %v164, 8
        %vm173 = vcmp.lt.s32.totalorder %v165, 8
        %vm174 = vmand %vm166, %vm170
        %vm175 = vmand %vm167, %vm171
        %vm176 = vmand %vm168, %vm172
        %vm177 = vmand %vm169, %vm173
        %v178 = vsel %vm166, 1, 0
        %v179 = vsel %vm167, 1, 0
        %v180 = vsel %vm168, 1, 0
        %v181 = vsel %vm169, 1, 0
        %v182 = vrot.slane %v178, 1
        %v183 = vrot.slane %v179, 1
        %v184 = vrot.slane %v180, 1
        %v185 = vrot.slane %v181, 1
        %vm186 = vcmp.ne.s32.totalorder %v182, 0
        %vm187 = vcmp.ne.s32.totalorder %v183, 0
        %vm188 = vcmp.ne.s32.totalorder %v184, 0
        %vm189 = vcmp.ne.s32.totalorder %v185, 0
        %vm190 = vmand %vm174, %vm186
        %vm191 = vmand %vm175, %vm187
        %vm192 = vmand %vm176, %vm188
        %vm193 = vmand %vm177, %vm189
        %v194 = vsel %vm170, 1, 0
        %v195 = vsel %vm171, 1, 0
        %v196 = vsel %vm172, 1, 0
        %v197 = vsel %vm173, 1, 0
        %v198 = vrot.slane %v194, 1
        %v199 = vrot.slane %v195, 1
        %v200 = vrot.slane %v196, 1
        %v201 = vrot.slane %v197, 1
        %vm202 = vcmp.ne.s32.totalorder %v198, 0
        %vm203 = vcmp.ne.s32.totalorder %v199, 0
        %vm204 = vcmp.ne.s32.totalorder %v200, 0
        %vm205 = vcmp.ne.s32.totalorder %v201, 0
        %vm206 = vmand %vm190, %vm202
        %vm207 = vmand %vm191, %vm203
        %vm208 = vmand %vm192, %vm204
        %vm209 = vmand %vm193, %vm205
        %v210 = vrot.slane %v178, 2
        %v211 = vrot.slane %v179, 2
        %v212 = vrot.slane %v180, 2
        %v213 = vrot.slane %v181, 2
        %vm214 = vcmp.ne.s32.totalorder %v210, 0
        %vm215 = vcmp.ne.s32.totalorder %v211, 0
        %vm216 = vcmp.ne.s32.totalorder %v212, 0
        %vm217 = vcmp.ne.s32.totalorder %v213, 0
        %vm218 = vmand %vm206, %vm214
        %vm219 = vmand %vm207, %vm215
        %vm220 = vmand %vm208, %vm216
        %vm221 = vmand %vm209, %vm217
        %vm222 = vcmp.lt.s32.totalorder %v162, 4
        %vm223 = vcmp.lt.s32.totalorder %v163, 4
        %vm224 = vcmp.lt.s32.totalorder %v164, 4
        %vm225 = vcmp.lt.s32.totalorder %v165, 4
        %v226 = vsel %vm222, 1, 0
        %v227 = vsel %vm223, 1, 0
        %v228 = vsel %vm224, 1, 0
        %v229 = vsel %vm225, 1, 0
        %v230 = vrot.slane %v226, 2
        %v231 = vrot.slane %v227, 2
        %v232 = vrot.slane %v228, 2
        %v233 = vrot.slane %v229, 2
        %vm234 = vcmp.ne.s32.totalorder %v230, 0
        %vm235 = vcmp.ne.s32.totalorder %v231, 0
        %vm236 = vcmp.ne.s32.totalorder %v232, 0
        %vm237 = vcmp.ne.s32.totalorder %v233, 0
        %vm238 = vmand %vm218, %vm234
        %vm239 = vmand %vm219, %vm235
        %vm240 = vmand %vm220, %vm236
        %vm241 = vmand %vm221, %vm237
        %vm242 = vcmp.gt.s32.totalorder %v162, 0
        %v243 = vsel %vm242, %v162, 0
        %vm244 = vcmp.gt.s32.totalorder %v163, 0
        %v245 = vsel %vm244, %v163, 0
        %vm246 = vcmp.gt.s32.totalorder %v164, 0
        %v247 = vsel %vm246, %v164, 0
        %vm248 = vcmp.gt.s32.totalorder %v165, 0
        %v249 = vsel %vm248, %v165, 0
        %vm250 = vcmp.lt.s32.totalorder %v243, 7
        %v251 = vsel %vm250, %v243, 7
        %vm252 = vcmp.lt.s32.totalorder %v245, 7
        %v253 = vsel %vm252, %v245, 7
        %vm254 = vcmp.lt.s32.totalorder %v247, 7
        %v255 = vsel %vm254, %v247, 7
        %vm256 = vcmp.lt.s32.totalorder %v249, 7
        %v257 = vsel %vm256, %v249, 7
        %vm258 = vcmp.lt.s32.totalorder %v243, 3
        %v259 = vsel %vm258, %v243, 3
        %vm260 = vcmp.lt.s32.totalorder %v245, 3
        %v261 = vsel %vm260, %v245, 3
        %vm262 = vcmp.lt.s32.totalorder %v247, 3
        %v263 = vsel %vm262, %v247, 3
        %vm264 = vcmp.lt.s32.totalorder %v249, 3
        %v265 = vsel %vm264, %v249, 3
        %v266 = vmul.u32 %v259, 8
        %v267 = vmul.u32 %v261, 8
        %v268 = vmul.u32 %v263, 8
        %v269 = vmul.u32 %v265, 8
        %v270 = vrot.slane %v251, 7
        %v271 = vrot.slane %v253, 7
        %v272 = vrot.slane %v255, 7
        %v273 = vrot.slane %v257, 7
        %v274 = vadd.s32 %v266, %v270
        %v275 = vadd.s32 %v267, %v271
        %v276 = vadd.s32 %v268, %v272
        %v277 = vadd.s32 %v269, %v273
        %v278 = vmul.u32 %v274, 8
        %v279 = vmul.u32 %v275, 8
        %v280 = vmul.u32 %v276, 8
        %v281 = vmul.u32 %v277, 8
        %v282 = vrot.slane %v251, 6
        %v283 = vrot.slane %v253, 6
        %v284 = vrot.slane %v255, 6
        %v285 = vrot.slane %v257, 6
        %v286 = vadd.s32 %v278, %v282
        %v287 = vadd.s32 %v279, %v283
        %v288 = vadd.s32 %v280, %v284
        %v289 = vadd.s32 %v281, %v285
        %v290 = vrot.slane %v286, 2
        %v291 = vrot.slane %v287, 2
        %v292 = vrot.slane %v288, 2
        %v293 = vrot.slane %v289, 2
        %v294 = vsel %vm238, %v290, 4294967295
        %v295 = vsel %vm239, %v291, 4294967295
        %v296 = vsel %vm240, %v292, 4294967295
        %v297 = vsel %vm241, %v293, 4294967295
        %v298 = vlaneseq
        %v299 = vshrl.u32 %v298, 7
        %v300 = vadd.s32 %v299, 8
        %v301 = vadd.s32 %v299, 16
        %v302 = vadd.s32 %v299, 24
        %v303 = vadd.s32 %v299, 32
        %v304 = vadd.s32 %v299, 40
        %v305 = vadd.s32 %v299, 48
        %v306 = vadd.s32 %v299, 56
        %v307 = vadd.s32 %v299, 64
        %v308 = vadd.s32 %v299, 72
        %v309 = vadd.s32 %v299, 80
        %v310 = vadd.s32 %v299, 88
        %v311 = vadd.s32 %v299, 96
        %v312 = vadd.s32 %v299, 104
        %v313 = vadd.s32 %v299, 112
        %v314 = vadd.s32 %v299, 120
        %v315 = vadd.s32 %v299, 128
        %v316 = vadd.s32 %v299, 136
        %v317 = vadd.s32 %v299, 144
        %v318 = vadd.s32 %v299, 152
        %v319 = vadd.s32 %v299, 160
        %v320 = vadd.s32 %v299, 168
        %v321 = vadd.s32 %v299, 176
        %v322 = vadd.s32 %v299, 184
        %v323 = vadd.s32 %v299, 192
        %v324 = vadd.s32 %v299, 200
        %v325 = vadd.s32 %v299, 208
        %v326 = vadd.s32 %v299, 216
        %v327 = vadd.s32 %v299, 224
        %v328 = vadd.s32 %v299, 232
        %v329 = vadd.s32 %v299, 240
        %v330 = vadd.s32 %v299, 248
        %v331 = vlaneseq
        %v332 = vshrl.u32 %v331, 7
        %v333 = vsub.s32 0, %v332
        %v334 = vrot.slane %v294, %v333
        %v335 = vlaneseq
        %v336 = vshrl.u32 %v335, 7
        %v337 = vsub.s32 0, %v336
        %v338 = vrot.slane %v295, %v337
        %v339 = vlaneseq
        %v340 = vshrl.u32 %v339, 7
        %v341 = vsub.s32 0, %v340
        %v342 = vrot.slane %v296, %v341
        %v343 = vlaneseq
        %v344 = vshrl.u32 %v343, 7
        %v345 = vsub.s32 0, %v344
        %v346 = vrot.slane %v297, %v345
        %vm347 = vcmp.eq.s32.totalorder %v334, %v299
        %vm348 = vcmp.eq.s32.totalorder %v338, %v299
        %vm349 = vcmp.eq.s32.totalorder %v342, %v299
        %vm350 = vcmp.eq.s32.totalorder %v346, %v299
        %vm351 = vcmp.eq.s32.totalorder %v334, %v300
        %vm352 = vcmp.eq.s32.totalorder %v338, %v300
        %vm353 = vcmp.eq.s32.totalorder %v342, %v300
        %vm354 = vcmp.eq.s32.totalorder %v346, %v300
        %vm355 = vcmp.eq.s32.totalorder %v334, %v301
        %vm356 = vcmp.eq.s32.totalorder %v338, %v301
        %vm357 = vcmp.eq.s32.totalorder %v342, %v301
        %vm358 = vcmp.eq.s32.totalorder %v346, %v301
        %vm359 = vcmp.eq.s32.totalorder %v334, %v302
        %vm360 = vcmp.eq.s32.totalorder %v338, %v302
        %vm361 = vcmp.eq.s32.totalorder %v342, %v302
        %vm362 = vcmp.eq.s32.totalorder %v346, %v302
        %vm363 = vcmp.eq.s32.totalorder %v334, %v303
        %vm364 = vcmp.eq.s32.totalorder %v338, %v303
        %vm365 = vcmp.eq.s32.totalorder %v342, %v303
        %vm366 = vcmp.eq.s32.totalorder %v346, %v303
        %vm367 = vcmp.eq.s32.totalorder %v334, %v304
        %vm368 = vcmp.eq.s32.totalorder %v338, %v304
        %vm369 = vcmp.eq.s32.totalorder %v342, %v304
        %vm370 = vcmp.eq.s32.totalorder %v346, %v304
        %vm371 = vcmp.eq.s32.totalorder %v334, %v305
        %vm372 = vcmp.eq.s32.totalorder %v338, %v305
        %vm373 = vcmp.eq.s32.totalorder %v342, %v305
        %vm374 = vcmp.eq.s32.totalorder %v346, %v305
        %vm375 = vcmp.eq.s32.totalorder %v334, %v306
        %vm376 = vcmp.eq.s32.totalorder %v338, %v306
        %vm377 = vcmp.eq.s32.totalorder %v342, %v306
        %vm378 = vcmp.eq.s32.totalorder %v346, %v306
        %vm379 = vcmp.eq.s32.totalorder %v334, %v307
        %vm380 = vcmp.eq.s32.totalorder %v338, %v307
        %vm381 = vcmp.eq.s32.totalorder %v342, %v307
        %vm382 = vcmp.eq.s32.totalorder %v346, %v307
        %vm383 = vcmp.eq.s32.totalorder %v334, %v308
        %vm384 = vcmp.eq.s32.totalorder %v338, %v308
        %vm385 = vcmp.eq.s32.totalorder %v342, %v308
        %vm386 = vcmp.eq.s32.totalorder %v346, %v308
        %vm387 = vcmp.eq.s32.totalorder %v334, %v309
        %vm388 = vcmp.eq.s32.totalorder %v338, %v309
        %vm389 = vcmp.eq.s32.totalorder %v342, %v309
        %vm390 = vcmp.eq.s32.totalorder %v346, %v309
        %vm391 = vcmp.eq.s32.totalorder %v334, %v310
        %vm392 = vcmp.eq.s32.totalorder %v338, %v310
        %vm393 = vcmp.eq.s32.totalorder %v342, %v310
        %vm394 = vcmp.eq.s32.totalorder %v346, %v310
        %vm395 = vcmp.eq.s32.totalorder %v334, %v311
        %vm396 = vcmp.eq.s32.totalorder %v338, %v311
        %vm397 = vcmp.eq.s32.totalorder %v342, %v311
        %vm398 = vcmp.eq.s32.totalorder %v346, %v311
        %vm399 = vcmp.eq.s32.totalorder %v334, %v312
        %vm400 = vcmp.eq.s32.totalorder %v338, %v312
        %vm401 = vcmp.eq.s32.totalorder %v342, %v312
        %vm402 = vcmp.eq.s32.totalorder %v346, %v312
        %vm403 = vcmp.eq.s32.totalorder %v334, %v313
        %vm404 = vcmp.eq.s32.totalorder %v338, %v313
        %vm405 = vcmp.eq.s32.totalorder %v342, %v313
        %vm406 = vcmp.eq.s32.totalorder %v346, %v313
        %vm407 = vcmp.eq.s32.totalorder %v334, %v314
        %vm408 = vcmp.eq.s32.totalorder %v338, %v314
        %vm409 = vcmp.eq.s32.totalorder %v342, %v314
        %vm410 = vcmp.eq.s32.totalorder %v346, %v314
        %vm411 = vcmp.eq.s32.totalorder %v334, %v315
        %vm412 = vcmp.eq.s32.totalorder %v338, %v315
        %vm413 = vcmp.eq.s32.totalorder %v342, %v315
        %vm414 = vcmp.eq.s32.totalorder %v346, %v315
        %vm415 = vcmp.eq.s32.totalorder %v334, %v316
        %vm416 = vcmp.eq.s32.totalorder %v338, %v316
        %vm417 = vcmp.eq.s32.totalorder %v342, %v316
        %vm418 = vcmp.eq.s32.totalorder %v346, %v316
        %vm419 = vcmp.eq.s32.totalorder %v334, %v317
        %vm420 = vcmp.eq.s32.totalorder %v338, %v317
        %vm421 = vcmp.eq.s32.totalorder %v342, %v317
        %vm422 = vcmp.eq.s32.totalorder %v346, %v317
        %vm423 = vcmp.eq.s32.totalorder %v334, %v318
        %vm424 = vcmp.eq.s32.totalorder %v338, %v318
        %vm425 = vcmp.eq.s32.totalorder %v342, %v318
        %vm426 = vcmp.eq.s32.totalorder %v346, %v318
        %vm427 = vcmp.eq.s32.totalorder %v334, %v319
        %vm428 = vcmp.eq.s32.totalorder %v338, %v319
        %vm429 = vcmp.eq.s32.totalorder %v342, %v319
        %vm430 = vcmp.eq.s32.totalorder %v346, %v319
        %vm431 = vcmp.eq.s32.totalorder %v334, %v320
        %vm432 = vcmp.eq.s32.totalorder %v338, %v320
        %vm433 = vcmp.eq.s32.totalorder %v342, %v320
        %vm434 = vcmp.eq.s32.totalorder %v346, %v320
        %vm435 = vcmp.eq.s32.totalorder %v334, %v321
        %vm436 = vcmp.eq.s32.totalorder %v338, %v321
        %vm437 = vcmp.eq.s32.totalorder %v342, %v321
        %vm438 = vcmp.eq.s32.totalorder %v346, %v321
        %vm439 = vcmp.eq.s32.totalorder %v334, %v322
        %vm440 = vcmp.eq.s32.totalorder %v338, %v322
        %vm441 = vcmp.eq.s32.totalorder %v342, %v322
        %vm442 = vcmp.eq.s32.totalorder %v346, %v322
        %vm443 = vcmp.eq.s32.totalorder %v334, %v323
        %vm444 = vcmp.eq.s32.totalorder %v338, %v323
        %vm445 = vcmp.eq.s32.totalorder %v342, %v323
        %vm446 = vcmp.eq.s32.totalorder %v346, %v323
        %vm447 = vcmp.eq.s32.totalorder %v334, %v324
        %vm448 = vcmp.eq.s32.totalorder %v338, %v324
        %vm449 = vcmp.eq.s32.totalorder %v342, %v324
        %vm450 = vcmp.eq.s32.totalorder %v346, %v324
        %vm451 = vcmp.eq.s32.totalorder %v334, %v325
        %vm452 = vcmp.eq.s32.totalorder %v338, %v325
        %vm453 = vcmp.eq.s32.totalorder %v342, %v325
        %vm454 = vcmp.eq.s32.totalorder %v346, %v325
        %vm455 = vcmp.eq.s32.totalorder %v334, %v326
        %vm456 = vcmp.eq.s32.totalorder %v338, %v326
        %vm457 = vcmp.eq.s32.totalorder %v342, %v326
        %vm458 = vcmp.eq.s32.totalorder %v346, %v326
        %vm459 = vcmp.eq.s32.totalorder %v334, %v327
        %vm460 = vcmp.eq.s32.totalorder %v338, %v327
        %vm461 = vcmp.eq.s32.totalorder %v342, %v327
        %vm462 = vcmp.eq.s32.totalorder %v346, %v327
        %vm463 = vcmp.eq.s32.totalorder %v334, %v328
        %vm464 = vcmp.eq.s32.totalorder %v338, %v328
        %vm465 = vcmp.eq.s32.totalorder %v342, %v328
        %vm466 = vcmp.eq.s32.totalorder %v346, %v328
        %vm467 = vcmp.eq.s32.totalorder %v334, %v329
        %vm468 = vcmp.eq.s32.totalorder %v338, %v329
        %vm469 = vcmp.eq.s32.totalorder %v342, %v329
        %vm470 = vcmp.eq.s32.totalorder %v346, %v329
        %vm471 = vcmp.eq.s32.totalorder %v334, %v330
        %vm472 = vcmp.eq.s32.totalorder %v338, %v330
        %vm473 = vcmp.eq.s32.totalorder %v342, %v330
        %vm474 = vcmp.eq.s32.totalorder %v346, %v330
        %v475 = vsel %vm347, 1, 0
        %v476 = vsel %vm348, 1, 0
        %v477 = vsel %vm349, 1, 0
        %v478 = vsel %vm350, 1, 0
        %v479 = vsel %vm351, 1, 0
        %v480 = vsel %vm352, 1, 0
        %v481 = vsel %vm353, 1, 0
        %v482 = vsel %vm354, 1, 0
        %v483 = vsel %vm355, 1, 0
        %v484 = vsel %vm356, 1, 0
        %v485 = vsel %vm357, 1, 0
        %v486 = vsel %vm358, 1, 0
        %v487 = vsel %vm359, 1, 0
        %v488 = vsel %vm360, 1, 0
        %v489 = vsel %vm361, 1, 0
        %v490 = vsel %vm362, 1, 0
        %v491 = vsel %vm363, 1, 0
        %v492 = vsel %vm364, 1, 0
        %v493 = vsel %vm365, 1, 0
        %v494 = vsel %vm366, 1, 0
        %v495 = vsel %vm367, 1, 0
        %v496 = vsel %vm368, 1, 0
        %v497 = vsel %vm369, 1, 0
        %v498 = vsel %vm370, 1, 0
        %v499 = vsel %vm371, 1, 0
        %v500 = vsel %vm372, 1, 0
        %v501 = vsel %vm373, 1, 0
        %v502 = vsel %vm374, 1, 0
        %v503 = vsel %vm375, 1, 0
        %v504 = vsel %vm376, 1, 0
        %v505 = vsel %vm377, 1, 0
        %v506 = vsel %vm378, 1, 0
        %v507 = vsel %vm379, 1, 0
        %v508 = vsel %vm380, 1, 0
        %v509 = vsel %vm381, 1, 0
        %v510 = vsel %vm382, 1, 0
        %v511 = vsel %vm383, 1, 0
        %v512 = vsel %vm384, 1, 0
        %v513 = vsel %vm385, 1, 0
        %v514 = vsel %vm386, 1, 0
        %v515 = vsel %vm387, 1, 0
        %v516 = vsel %vm388, 1, 0
        %v517 = vsel %vm389, 1, 0
        %v518 = vsel %vm390, 1, 0
        %v519 = vsel %vm391, 1, 0
        %v520 = vsel %vm392, 1, 0
        %v521 = vsel %vm393, 1, 0
        %v522 = vsel %vm394, 1, 0
        %v523 = vsel %vm395, 1, 0
        %v524 = vsel %vm396, 1, 0
        %v525 = vsel %vm397, 1, 0
        %v526 = vsel %vm398, 1, 0
        %v527 = vsel %vm399, 1, 0
        %v528 = vsel %vm400, 1, 0
        %v529 = vsel %vm401, 1, 0
        %v530 = vsel %vm402, 1, 0
        %v531 = vsel %vm403, 1, 0
        %v532 = vsel %vm404, 1, 0
        %v533 = vsel %vm405, 1, 0
        %v534 = vsel %vm406, 1, 0
        %v535 = vsel %vm407, 1, 0
        %v536 = vsel %vm408, 1, 0
        %v537 = vsel %vm409, 1, 0
        %v538 = vsel %vm410, 1, 0
        %v539 = vsel %vm411, 1, 0
        %v540 = vsel %vm412, 1, 0
        %v541 = vsel %vm413, 1, 0
        %v542 = vsel %vm414, 1, 0
        %v543 = vsel %vm415, 1, 0
        %v544 = vsel %vm416, 1, 0
        %v545 = vsel %vm417, 1, 0
        %v546 = vsel %vm418, 1, 0
        %v547 = vsel %vm419, 1, 0
        %v548 = vsel %vm420, 1, 0
        %v549 = vsel %vm421, 1, 0
        %v550 = vsel %vm422, 1, 0
        %v551 = vsel %vm423, 1, 0
        %v552 = vsel %vm424, 1, 0
        %v553 = vsel %vm425, 1, 0
        %v554 = vsel %vm426, 1, 0
        %v555 = vsel %vm427, 1, 0
        %v556 = vsel %vm428, 1, 0
        %v557 = vsel %vm429, 1, 0
        %v558 = vsel %vm430, 1, 0
        %v559 = vsel %vm431, 1, 0
        %v560 = vsel %vm432, 1, 0
        %v561 = vsel %vm433, 1, 0
        %v562 = vsel %vm434, 1, 0
        %v563 = vsel %vm435, 1, 0
        %v564 = vsel %vm436, 1, 0
        %v565 = vsel %vm437, 1, 0
        %v566 = vsel %vm438, 1, 0
        %v567 = vsel %vm439, 1, 0
        %v568 = vsel %vm440, 1, 0
        %v569 = vsel %vm441, 1, 0
        %v570 = vsel %vm442, 1, 0
        %v571 = vsel %vm443, 1, 0
        %v572 = vsel %vm444, 1, 0
        %v573 = vsel %vm445, 1, 0
        %v574 = vsel %vm446, 1, 0
        %v575 = vsel %vm447, 1, 0
        %v576 = vsel %vm448, 1, 0
        %v577 = vsel %vm449, 1, 0
        %v578 = vsel %vm450, 1, 0
        %v579 = vsel %vm451, 1, 0
        %v580 = vsel %vm452, 1, 0
        %v581 = vsel %vm453, 1, 0
        %v582 = vsel %vm454, 1, 0
        %v583 = vsel %vm455, 1, 0
        %v584 = vsel %vm456, 1, 0
        %v585 = vsel %vm457, 1, 0
        %v586 = vsel %vm458, 1, 0
        %v587 = vsel %vm459, 1, 0
        %v588 = vsel %vm460, 1, 0
        %v589 = vsel %vm461, 1, 0
        %v590 = vsel %vm462, 1, 0
        %v591 = vsel %vm463, 1, 0
        %v592 = vsel %vm464, 1, 0
        %v593 = vsel %vm465, 1, 0
        %v594 = vsel %vm466, 1, 0
        %v595 = vsel %vm467, 1, 0
        %v596 = vsel %vm468, 1, 0
        %v597 = vsel %vm469, 1, 0
        %v598 = vsel %vm470, 1, 0
        %v599 = vsel %vm471, 1, 0
        %v600 = vsel %vm472, 1, 0
        %v601 = vsel %vm473, 1, 0
        %v602 = vsel %vm474, 1, 0
        %v603 = vcvt.s32.f32 %v475
        %v604 = vcvt.s32.f32 %v476
        %v605 = vcvt.s32.f32 %v477
        %v606 = vcvt.s32.f32 %v478
        %v607 = vcvt.s32.f32 %v479
        %v608 = vcvt.s32.f32 %v480
        %v609 = vcvt.s32.f32 %v481
        %v610 = vcvt.s32.f32 %v482
        %v611 = vcvt.s32.f32 %v483
        %v612 = vcvt.s32.f32 %v484
        %v613 = vcvt.s32.f32 %v485
        %v614 = vcvt.s32.f32 %v486
        %v615 = vcvt.s32.f32 %v487
        %v616 = vcvt.s32.f32 %v488
        %v617 = vcvt.s32.f32 %v489
        %v618 = vcvt.s32.f32 %v490
        %v619 = vcvt.s32.f32 %v491
        %v620 = vcvt.s32.f32 %v492
        %v621 = vcvt.s32.f32 %v493
        %v622 = vcvt.s32.f32 %v494
        %v623 = vcvt.s32.f32 %v495
        %v624 = vcvt.s32.f32 %v496
        %v625 = vcvt.s32.f32 %v497
        %v626 = vcvt.s32.f32 %v498
        %v627 = vcvt.s32.f32 %v499
        %v628 = vcvt.s32.f32 %v500
        %v629 = vcvt.s32.f32 %v501
        %v630 = vcvt.s32.f32 %v502
        %v631 = vcvt.s32.f32 %v503
        %v632 = vcvt.s32.f32 %v504
        %v633 = vcvt.s32.f32 %v505
        %v634 = vcvt.s32.f32 %v506
        %v635 = vcvt.s32.f32 %v507
        %v636 = vcvt.s32.f32 %v508
        %v637 = vcvt.s32.f32 %v509
        %v638 = vcvt.s32.f32 %v510
        %v639 = vcvt.s32.f32 %v511
        %v640 = vcvt.s32.f32 %v512
        %v641 = vcvt.s32.f32 %v513
        %v642 = vcvt.s32.f32 %v514
        %v643 = vcvt.s32.f32 %v515
        %v644 = vcvt.s32.f32 %v516
        %v645 = vcvt.s32.f32 %v517
        %v646 = vcvt.s32.f32 %v518
        %v647 = vcvt.s32.f32 %v519
        %v648 = vcvt.s32.f32 %v520
        %v649 = vcvt.s32.f32 %v521
        %v650 = vcvt.s32.f32 %v522
        %v651 = vcvt.s32.f32 %v523
        %v652 = vcvt.s32.f32 %v524
        %v653 = vcvt.s32.f32 %v525
        %v654 = vcvt.s32.f32 %v526
        %v655 = vcvt.s32.f32 %v527
        %v656 = vcvt.s32.f32 %v528
        %v657 = vcvt.s32.f32 %v529
        %v658 = vcvt.s32.f32 %v530
        %v659 = vcvt.s32.f32 %v531
        %v660 = vcvt.s32.f32 %v532
        %v661 = vcvt.s32.f32 %v533
        %v662 = vcvt.s32.f32 %v534
        %v663 = vcvt.s32.f32 %v535
        %v664 = vcvt.s32.f32 %v536
        %v665 = vcvt.s32.f32 %v537
        %v666 = vcvt.s32.f32 %v538
        %v667 = vcvt.s32.f32 %v539
        %v668 = vcvt.s32.f32 %v540
        %v669 = vcvt.s32.f32 %v541
        %v670 = vcvt.s32.f32 %v542
        %v671 = vcvt.s32.f32 %v543
        %v672 = vcvt.s32.f32 %v544
        %v673 = vcvt.s32.f32 %v545
        %v674 = vcvt.s32.f32 %v546
        %v675 = vcvt.s32.f32 %v547
        %v676 = vcvt.s32.f32 %v548
        %v677 = vcvt.s32.f32 %v549
        %v678 = vcvt.s32.f32 %v550
        %v679 = vcvt.s32.f32 %v551
        %v680 = vcvt.s32.f32 %v552
        %v681 = vcvt.s32.f32 %v553
        %v682 = vcvt.s32.f32 %v554
        %v683 = vcvt.s32.f32 %v555
        %v684 = vcvt.s32.f32 %v556
        %v685 = vcvt.s32.f32 %v557
        %v686 = vcvt.s32.f32 %v558
        %v687 = vcvt.s32.f32 %v559
        %v688 = vcvt.s32.f32 %v560
        %v689 = vcvt.s32.f32 %v561
        %v690 = vcvt.s32.f32 %v562
        %v691 = vcvt.s32.f32 %v563
        %v692 = vcvt.s32.f32 %v564
        %v693 = vcvt.s32.f32 %v565
        %v694 = vcvt.s32.f32 %v566
        %v695 = vcvt.s32.f32 %v567
        %v696 = vcvt.s32.f32 %v568
        %v697 = vcvt.s32.f32 %v569
        %v698 = vcvt.s32.f32 %v570
        %v699 = vcvt.s32.f32 %v571
        %v700 = vcvt.s32.f32 %v572
        %v701 = vcvt.s32.f32 %v573
        %v702 = vcvt.s32.f32 %v574
        %v703 = vcvt.s32.f32 %v575
        %v704 = vcvt.s32.f32 %v576
        %v705 = vcvt.s32.f32 %v577
        %v706 = vcvt.s32.f32 %v578
        %v707 = vcvt.s32.f32 %v579
        %v708 = vcvt.s32.f32 %v580
        %v709 = vcvt.s32.f32 %v581
        %v710 = vcvt.s32.f32 %v582
        %v711 = vcvt.s32.f32 %v583
        %v712 = vcvt.s32.f32 %v584
        %v713 = vcvt.s32.f32 %v585
        %v714 = vcvt.s32.f32 %v586
        %v715 = vcvt.s32.f32 %v587
        %v716 = vcvt.s32.f32 %v588
        %v717 = vcvt.s32.f32 %v589
        %v718 = vcvt.s32.f32 %v590
        %v719 = vcvt.s32.f32 %v591
        %v720 = vcvt.s32.f32 %v592
        %v721 = vcvt.s32.f32 %v593
        %v722 = vcvt.s32.f32 %v594
        %v723 = vcvt.s32.f32 %v595
        %v724 = vcvt.s32.f32 %v596
        %v725 = vcvt.s32.f32 %v597
        %v726 = vcvt.s32.f32 %v598
        %v727 = vcvt.s32.f32 %v599
        %v728 = vcvt.s32.f32 %v600
        %v729 = vcvt.s32.f32 %v601
        %v730 = vcvt.s32.f32 %v602
        %731 = vmatprep.subr.mxu0 %v604
        %732 = vmatpush1.xpose.msra.mxu0 %v603
        %733 = vmatprep.subr.mxu0 %v608
        %734 = vmatpush1.xpose.msra.mxu0 %v607
        %735 = vmatprep.subr.mxu0 %v612
        %736 = vmatpush1.xpose.msra.mxu0 %v611
        %737 = vmatprep.subr.mxu0 %v616
        %738 = vmatpush1.xpose.msra.mxu0 %v615
        %739 = vmatprep.subr.mxu0 %v620
        %740 = vmatpush1.xpose.msra.mxu0 %v619
        %741 = vmatprep.subr.mxu0 %v624
        %742 = vmatpush1.xpose.msra.mxu0 %v623
        %743 = vmatprep.subr.mxu0 %v628
        %744 = vmatpush1.xpose.msra.mxu0 %v627
        %745 = vmatprep.subr.mxu0 %v632
        %746 = vmatpush1.xpose.msra.mxu0 %v631
        %747 = vmatprep.subr.mxu0 %v636
        %748 = vmatpush1.xpose.msra.mxu0 %v635
        %749 = vmatprep.subr.mxu0 %v640
        %750 = vmatpush1.xpose.msra.mxu0 %v639
        %751 = vmatprep.subr.mxu0 %v644
        %752 = vmatpush1.xpose.msra.mxu0 %v643
        %753 = vmatprep.subr.mxu0 %v648
        %754 = vmatpush1.xpose.msra.mxu0 %v647
        %755 = vmatprep.subr.mxu0 %v652
        %756 = vmatpush1.xpose.msra.mxu0 %v651
        %757 = vmatprep.subr.mxu0 %v656
        %758 = vmatpush1.xpose.msra.mxu0 %v655
        %759 = vmatprep.subr.mxu0 %v660
        %760 = vmatpush1.xpose.msra.mxu0 %v659
        %761 = vmatprep.subr.mxu0 %v664
        %762 = vmatpush1.xpose.msra.mxu0 %v663
        %763 = vmatprep.subr.mxu0 %v668
        %764 = vmatpush1.xpose.msra.mxu0 %v667
        %765 = vmatprep.subr.mxu0 %v672
        %766 = vmatpush1.xpose.msra.mxu0 %v671
        %767 = vmatprep.subr.mxu0 %v676
        %768 = vmatpush1.xpose.msra.mxu0 %v675
        %769 = vmatprep.subr.mxu0 %v680
        %770 = vmatpush1.xpose.msra.mxu0 %v679
        %771 = vmatprep.subr.mxu0 %v684
        %772 = vmatpush1.xpose.msra.mxu0 %v683
        %773 = vmatprep.subr.mxu0 %v688
        %774 = vmatpush1.xpose.msra.mxu0 %v687
        %775 = vmatprep.subr.mxu0 %v692
        %776 = vmatpush1.xpose.msra.mxu0 %v691
        %777 = vmatprep.subr.mxu0 %v696
        %778 = vmatpush1.xpose.msra.mxu0 %v695
        %779 = vmatprep.subr.mxu0 %v700
        %780 = vmatpush1.xpose.msra.mxu0 %v699
        %781 = vmatprep.subr.mxu0 %v704
        %782 = vmatpush1.xpose.msra.mxu0 %v703
        %783 = vmatprep.subr.mxu0 %v708
        %784 = vmatpush1.xpose.msra.mxu0 %v707
        %785 = vmatprep.subr.mxu0 %v712
        %786 = vmatpush1.xpose.msra.mxu0 %v711
        %787 = vmatprep.subr.mxu0 %v716
        %788 = vmatpush1.xpose.msra.mxu0 %v715
        %789 = vmatprep.subr.mxu0 %v720
        %790 = vmatpush1.xpose.msra.mxu0 %v719
        %791 = vmatprep.subr.mxu0 %v724
        %792 = vmatpush1.xpose.msra.mxu0 %v723
        %793 = vmatprep.subr.mxu0 %v728
        %794 = vmatpush1.xpose.msra.mxu0 %v727
        %795 = vmatprep.mubr.f32.mxu0 %v151
        %796 = vmatmul.mubr.f32.gmra.mrb[0].mxu0 %v150
        %v797 = vpop.f32.mrb[0].mxu0
        %v798 = vadd.f32 0.0, %v797
        %v799 = vpop.f32.mrb[0].mxu0
        %v800 = vadd.f32 0.0, %v799
        %801 = vdwg.mxu0
        %802 = vmatprep.subr.mxu0 %v606
        %803 = vmatpush1.xpose.msra.mxu0 %v605
        %804 = vmatprep.subr.mxu0 %v610
        %805 = vmatpush1.xpose.msra.mxu0 %v609
        %806 = vmatprep.subr.mxu0 %v614
        %807 = vmatpush1.xpose.msra.mxu0 %v613
        %808 = vmatprep.subr.mxu0 %v618
        %809 = vmatpush1.xpose.msra.mxu0 %v617
        %810 = vmatprep.subr.mxu0 %v622
        %811 = vmatpush1.xpose.msra.mxu0 %v621
        %812 = vmatprep.subr.mxu0 %v626
        %813 = vmatpush1.xpose.msra.mxu0 %v625
        %814 = vmatprep.subr.mxu0 %v630
        %815 = vmatpush1.xpose.msra.mxu0 %v629
        %816 = vmatprep.subr.mxu0 %v634
        %817 = vmatpush1.xpose.msra.mxu0 %v633
        %818 = vmatprep.subr.mxu0 %v638
        %819 = vmatpush1.xpose.msra.mxu0 %v637
        %820 = vmatprep.subr.mxu0 %v642
        %821 = vmatpush1.xpose.msra.mxu0 %v641
        %822 = vmatprep.subr.mxu0 %v646
        %823 = vmatpush1.xpose.msra.mxu0 %v645
        %824 = vmatprep.subr.mxu0 %v650
        %825 = vmatpush1.xpose.msra.mxu0 %v649
        %826 = vmatprep.subr.mxu0 %v654
        %827 = vmatpush1.xpose.msra.mxu0 %v653
        %828 = vmatprep.subr.mxu0 %v658
        %829 = vmatpush1.xpose.msra.mxu0 %v657
        %830 = vmatprep.subr.mxu0 %v662
        %831 = vmatpush1.xpose.msra.mxu0 %v661
        %832 = vmatprep.subr.mxu0 %v666
        %833 = vmatpush1.xpose.msra.mxu0 %v665
        %834 = vmatprep.subr.mxu0 %v670
        %835 = vmatpush1.xpose.msra.mxu0 %v669
        %836 = vmatprep.subr.mxu0 %v674
        %837 = vmatpush1.xpose.msra.mxu0 %v673
        %838 = vmatprep.subr.mxu0 %v678
        %839 = vmatpush1.xpose.msra.mxu0 %v677
        %840 = vmatprep.subr.mxu0 %v682
        %841 = vmatpush1.xpose.msra.mxu0 %v681
        %842 = vmatprep.subr.mxu0 %v686
        %843 = vmatpush1.xpose.msra.mxu0 %v685
        %844 = vmatprep.subr.mxu0 %v690
        %845 = vmatpush1.xpose.msra.mxu0 %v689
        %846 = vmatprep.subr.mxu0 %v694
        %847 = vmatpush1.xpose.msra.mxu0 %v693
        %848 = vmatprep.subr.mxu0 %v698
        %849 = vmatpush1.xpose.msra.mxu0 %v697
        %850 = vmatprep.subr.mxu0 %v702
        %851 = vmatpush1.xpose.msra.mxu0 %v701
        %852 = vmatprep.subr.mxu0 %v706
        %853 = vmatpush1.xpose.msra.mxu0 %v705
        %854 = vmatprep.subr.mxu0 %v710
        %855 = vmatpush1.xpose.msra.mxu0 %v709
        %856 = vmatprep.subr.mxu0 %v714
        %857 = vmatpush1.xpose.msra.mxu0 %v713
        %858 = vmatprep.subr.mxu0 %v718
        %859 = vmatpush1.xpose.msra.mxu0 %v717
        %860 = vmatprep.subr.mxu0 %v722
        %861 = vmatpush1.xpose.msra.mxu0 %v721
        %862 = vmatprep.subr.mxu0 %v726
        %863 = vmatpush1.xpose.msra.mxu0 %v725
        %864 = vmatprep.subr.mxu0 %v730
        %865 = vmatpush1.xpose.msra.mxu0 %v729
        %866 = vmatprep.mubr.f32.mxu0 %v153
        %867 = vmatmul.mubr.f32.gmra.mrb[0].mxu0 %v152
        %v868 = vpop.f32.mrb[0].mxu0
        %v869 = vadd.f32 %v798, %v868
        %v870 = vpop.f32.mrb[0].mxu0
        %v871 = vadd.f32 %v800, %v870
        %872 = vdwg.mxu0
        %p873 = scmp.eq.s32.totalorder %s23, 0
        // Predicated region
        $region29: #{voxelize_dense.1} parent=23 // pred_check
          %p874 = pneg %p873
        $region30: #{voxelize_dense.1} parent=23 // pred_check_branch
          %876 = sbr.rel (%p874) target = $region32
        $region31: #{voxelize_dense.1} parent=23 // pred_region
          %877 = vst [vmem:[%s148] sm:$0xff] 0.0
          %878 = vst [vmem:[%s148 + $0x8] sm:$0xff] 0.0
        $region32: #{voxelize_dense.1} parent=23 // pred_fallthru
          _
        %v879 = vld [vmem:[%s148] sm:$0xff]
        %v880 = vld [vmem:[%s148 + $0x8] sm:$0xff]
        %v881 = vadd.f32 %v879, %v869
        %v882 = vadd.f32 %v880, %v871
        %883 = vst [vmem:[%s148] sm:$0xff] %v881
        %884 = vst [vmem:[%s148 + $0x8] sm:$0xff] %v882
        %s885 = sand.u32 %s66, 1
        %s886 = scalar_lea.sflag [#allocation4], %s885
        %s887 = sand.u32 %s66, 1
        %s888 = smul.addr %s887, 16
        %s889 = scalar_lea.vmem [#allocation5], %s888
        // Predicated region
        $region33: #{voxelize_dense.1} parent=23 // pred_check
          %p890 = pneg %p76
        $region34: #{voxelize_dense.1} parent=23 // pred_check_branch
          %892 = sbr.rel (%p890) target = $region36
        $region35: #{voxelize_dense.1} parent=23 // pred_region
          %s894 = ssub.s32 256, 256
          %895 = vsyncadd %s886, %s894
          %s896 = smul.addr %s22, 2
          %s897 = smul.addr %s896, 128
          %s898 = scalar_lea.hbm %s1, %s897
          %s900 = sshll.u32 %s889, 4
          %s901 = int_to_ptr.vmem [resolvable:$true] %s900
          %903 = dma.vmem_to_hbm [thread:$0]  %s901, 256, %s898, %s886
        $region36: #{voxelize_dense.1} parent=23 // pred_fallthru
          _
      $region24: #{voxelize_dense.1} parent=5 // pred_fallthru
        _
      %p904 = scmp.le.s32.totalorder 2, %s13
      // Predicated region
      $region37: #{voxelize_dense.1} parent=5 // pred_check
        %p905 = pneg %p904
      $region38: #{voxelize_dense.1} parent=5 // pred_check_branch
        %907 = sbr.rel (%p905) target = $region40
      $region39: #{voxelize_dense.1} parent=5 // pred_region
        %s908 = ssub.s32 %s13, 2
        // Predicated region
        $region41: #{voxelize_dense.1} parent=39 // pred_check
          %p909 = pneg %p82
        $region42: #{voxelize_dense.1} parent=39 // pred_check_branch
          %911 = sbr.rel (%p909) target = $region44
        $region43: #{voxelize_dense.1} parent=39 // pred_region
          %s912 = sand.u32 %s67, 1
          %s913 = scalar_lea.sflag [#allocation4], %s912
          %s914 = sand.u32 %s67, 1
          %s915 = smul.addr %s914, 16
          %s916 = scalar_lea.vmem [#allocation5], %s915
          %917 = dma.done %s913, 256
        $region44: #{voxelize_dense.1} parent=39 // pred_fallthru
          _
      $region40: #{voxelize_dense.1} parent=5 // pred_fallthru
        _
    $region6: #{voxelize_dense.1} parent=1 // loop_footer
      %s17 = sadd.s32 1, %s13
    $region7: #{voxelize_dense.1} parent=1 // loop_footer_branch
      %12 = sbr.rel target = $region3
    $region8: #{voxelize_dense.1} parent=1 // loop_exit
      _
    %918 = vsyncpa [#allocation3], 1
    %s919 = scalar_lea.sflag [#allocation3], 1
    %920 = vsyncpa %s919, 1
    %921 = vsyncpa [#allocation4], 1
    %s922 = scalar_lea.sflag [#allocation4], 1
    %923 = vsyncpa %s922, 1

</llo_original>
